<compile_context>
chip_gen: v7x
topology: tpu7x:2x2x1
jax: 0.10.0
libtpu: 0.0.40
codegen_flags: <defaults>
</compile_context>

<pallas_src>
import jax
import jax.numpy as jnp
from jax.experimental import pallas as pl
from jax.experimental.pallas import tpu as pltpu

# ---- synthetic config (conf.PESLA_4_Well.*) ----
IN_DIM = 2        # (x, y) coordinate of the 4-well particle
HIDDEN = 32
CODE_DIM = 32     # conf.PESLA_4_Well.code_dim
K = 64            # conf.PESLA_4_Well.K
KP = 128          # codebook lane-padded to a full vreg lane width
OUT_W = 128       # single lane-dense output stream width
TILE_B = 4096     # batch tile; ~8 MiB double-buffered I/O + ~20 MiB temporaries
VMEM_LIMIT = 48 * 1024 * 1024


def _round_up(n, m):
    return ((n + m - 1) // m) * m


def pesla_kernel(x_ref, w1_ref, b1_ref, wf_ref, bf_ref, e2_ref, table_ref,
                 out_ref):
    f32 = jnp.float32
    x = x_ref[...]                                                     # (tb, 2)

    # ---- encoder layer 1 on the VPU (K=2 contraction is too degenerate for MXU)
    h = jnp.tanh(x[:, 0:1] * w1_ref[0:1, :]
                 + x[:, 1:2] * w1_ref[1:2, :]
                 + b1_ref[...])                                        # (tb, H)

    # ---- fused encoder layer 2 + codebook score (single MXU pass, N = KP + C):
    # lanes [0:KP]  = z_e @ emb.T (bias b2 @ emb.T folded in), pad-code cols are 0
    # lanes [KP: ]  = z_e
    fused = jnp.dot(h, wf_ref[...], preferred_element_type=f32) + bf_ref[...]
    score = fused[:, :KP]                                              # (tb, KP) lane-aligned
    z_e = fused[:, KP:]                                                # (tb, C)

    # ---- greedy NN on the proxy distance e2 - 2<z_e, e>  (the z_e^2 term is
    #      row-constant and never changes the argmin; pad columns carry e2=1e30)
    dist = e2_ref[...] - 2.0 * score                                   # (tb, KP)
    iota = jax.lax.broadcasted_iota(jnp.int32, dist.shape, 1)
    dmin = jnp.min(dist, axis=-1, keepdims=True)
    # first index attaining the minimum (matches torch argmin tie-break)
    idx = jnp.min(jnp.where(dist <= dmin, iota, KP), axis=-1, keepdims=True)

    # ---- one-hot gather of the per-code decoder lookup table (second MXU pass):
    # lanes [C:2C]=z_q, [2C:2C+2]=mu, [2C+2:2C+4]=std, [2C+4]=idx, rest 0
    onehot = (iota == idx).astype(f32)                                 # (tb, KP)
    gathered = jnp.dot(onehot, table_ref[...], preferred_element_type=f32)  # (tb, OUT_W)

    out_ref[...] = gathered                     # full unmasked 128-lane store
    out_ref[:, 0:CODE_DIM] = z_e                # z_e into the zeroed [0:C] lanes


def pesla_forward(x, kparams, tile_b=TILE_B):
    B = x.shape[0]
    tb = min(tile_b, _round_up(B, 8))
    Bp = _round_up(B, tb)
    if Bp != B:
        x = jnp.pad(x, ((0, Bp - B), (0, 0)))
    grid = (Bp // tb,)

    def row_spec(width):
        return pl.BlockSpec((tb, width), lambda i: (i, 0))

    def const_spec(a):
        return pl.BlockSpec(a.shape, lambda i: (0, 0))

    weight_order = ("w1", "b1", "wf", "bf", "e2", "table")
    weights = [kparams[k] for k in weight_order]

    out = pl.pallas_call(
        pesla_kernel,
        grid=grid,
        in_specs=[row_spec(IN_DIM)] + [const_spec(w) for w in weights],
        out_specs=row_spec(OUT_W),
        out_shape=jax.ShapeDtypeStruct((Bp, OUT_W), jnp.float32),
        compiler_params=pltpu.CompilerParams(
            dimension_semantics=("parallel",),
            vmem_limit_bytes=VMEM_LIMIT),
    )(x, *weights)

    C = CODE_DIM
    z_e = out[:B, 0:C]
    z_q = out[:B, C:2 * C]
    mu = out[:B, 2 * C:2 * C + 2]
    std = out[:B, 2 * C + 2:2 * C + 4]
    idx = out[:B, 2 * C + 4].astype(jnp.int32)
    x_recons = mu                      # decoder reconstruction == mu in this AE
    return x_recons, z_e, z_q, idx, mu, std


def init_params(key):
    """Logical parameters, initialized per weights_init (Linear N(0,0.01), bias 0;
    codebook embedding uniform(-1/K, 1/K))."""
    ks = jax.random.split(key, 6)

    def linear(k, fan_in, fan_out):
        w = 0.01 * jax.random.normal(k, (fan_in, fan_out), jnp.float32)
        b = jnp.zeros((1, fan_out), jnp.float32)
        return w, b

    w1, b1 = linear(ks[0], IN_DIM, HIDDEN)
    w2, b2 = linear(ks[1], HIDDEN, CODE_DIM)
    wd1, bd1 = linear(ks[2], CODE_DIM, HIDDEN)
    wmu, bmu = linear(ks[3], HIDDEN, IN_DIM)
    wstd, bstd = linear(ks[4], HIDDEN, IN_DIM)
    emb = jax.random.uniform(ks[5], (K, CODE_DIM), jnp.float32, -1.0 / K, 1.0 / K)
    return dict(w1=w1, b1=b1, w2=w2, b2=b2, emb=emb,
                wd1=wd1, bd1=bd1, wmu=wmu, bmu=bmu, wstd=wstd, bstd=bstd)


def pack_params(p):
    """Host-side packing: fuse encoder layer-2 with the codebook score matmul and
    collapse the whole decoder into a per-code lookup table (the decoder output is
    a pure function of the selected code, K=64 discrete values)."""
    C, H = CODE_DIM, HIDDEN
    emb = p["emb"]                                                     # (K, C)

    # codebook lane-padded K -> KP; pad-code columns are zero
    embT_pad = jnp.zeros((C, KP), jnp.float32).at[:, :K].set(emb.T)    # (C, KP)

    # fused weight: lanes [0:KP] -> codebook score, lanes [KP:KP+C] -> z_e
    wf = jnp.concatenate([p["w2"] @ embT_pad, p["w2"]], axis=1)        # (H, KP + C)
    bf = jnp.concatenate([p["b2"] @ embT_pad, p["b2"]], axis=1)        # (1, KP + C)

    # per-code squared norm; pad columns get "infinite" e2 so they never win
    e2 = jnp.full((1, KP), 1e30, jnp.float32).at[:, :K].set(
        jnp.sum(emb * emb, axis=1)[None, :])

    # per-code decoder lookup table, precomputed once in f32 on the host
    hd = jnp.tanh(emb @ p["wd1"] + p["bd1"])                           # (K, H)
    mu_k = hd @ p["wmu"] + p["bmu"]                                    # (K, 2)
    std_k = jax.nn.softplus(hd @ p["wstd"] + p["bstd"]) + 1e-6         # (K, 2)
    table = (jnp.zeros((KP, OUT_W), jnp.float32)
             .at[:K, C:2 * C].set(emb)                                 # z_q lanes
             .at[:K, 2 * C:2 * C + 2].set(mu_k)                        # mu lanes
             .at[:K, 2 * C + 2:2 * C + 4].set(std_k)                   # std lanes
             .at[:K, 2 * C + 4].set(jnp.arange(K, dtype=jnp.float32))) # idx lane

    return dict(w1=p["w1"], b1=p["b1"], wf=wf, bf=bf, e2=e2, table=table)


def pesla_forward_ref(x, p):
    """Pure-JAX reference for validation (unpadded logical params)."""
    emb = p["emb"]
    h = jnp.tanh(x @ p["w1"] + p["b1"])
    z_e = h @ p["w2"] + p["b2"]
    dist = (jnp.sum(z_e ** 2, -1, keepdims=True) - 2.0 * z_e @ emb.T
            + jnp.sum(emb ** 2, -1)[None, :])
    idx = jnp.argmin(dist, axis=-1)
    z_q = emb[idx]
    hd = jnp.tanh(z_q @ p["wd1"] + p["bd1"])
    mu = hd @ p["wmu"] + p["bmu"]
    std = jax.nn.softplus(hd @ p["wstd"] + p["bstd"]) + 1e-6
    return mu, z_e, z_q, idx, mu, std


if __name__ == "__main__":
    key = jax.random.PRNGKey(0)
    k_param, k_x = jax.random.split(key)
    params = init_params(k_param)
    kparams = pack_params(params)

    x = jax.random.normal(k_x, (8, IN_DIM), jnp.float32)  # batch of 8 (x, y) points

    outs = jax.block_until_ready(pesla_forward(x, kparams))
    refs = pesla_forward_ref(x, params)

    names = ["x_recons", "z_e_x", "z_q_x", "code_idx", "mu", "std"]
    for name, o, r in zip(names, outs, refs):
        if name == "code_idx":
            assert (o == r).all(), f"{name} mismatch"
        else:
            assert jnp.allclose(o, r, atol=1e-5, rtol=1e-5), f"{name} mismatch"

    print("KERNEL_OK")
</pallas_src>

<mosaic_0001>
module attributes {stable_mosaic.version = 11 : i64} {
  func.func @pesla_kernel(%arg0: i32, %arg1: memref<8x2xf32, #tpu.memory_space<vmem>>, %arg2: memref<2x32xf32, #tpu.memory_space<vmem>>, %arg3: memref<1x32xf32, #tpu.memory_space<vmem>>, %arg4: memref<32x160xf32, #tpu.memory_space<vmem>>, %arg5: memref<1x160xf32, #tpu.memory_space<vmem>>, %arg6: memref<1x128xf32, #tpu.memory_space<vmem>>, %arg7: memref<128x128xf32, #tpu.memory_space<vmem>>, %arg8: memref<8x128xf32, #tpu.memory_space<vmem>>) attributes {dimension_semantics = [#tpu.dimension_semantics<parallel>], iteration_bounds = array<i64: 1>, scalar_prefetch = 0 : i64, scratch_operands = 0 : i64, tpu.core_type = #tpu.core_type<tc>, window_params = [{transform_indices = @transform_0, window_bounds = array<i64: 8, 2>}, {pipeline_mode = #tpu.pipeline_mode<synchronous>, transform_indices = @transform_1, window_bounds = array<i64: 2, 32>}, {pipeline_mode = #tpu.pipeline_mode<synchronous>, transform_indices = @transform_2, window_bounds = array<i64: 1, 32>}, {pipeline_mode = #tpu.pipeline_mode<synchronous>, transform_indices = @transform_3, window_bounds = array<i64: 32, 160>}, {pipeline_mode = #tpu.pipeline_mode<synchronous>, transform_indices = @transform_4, window_bounds = array<i64: 1, 160>}, {pipeline_mode = #tpu.pipeline_mode<synchronous>, transform_indices = @transform_5, window_bounds = array<i64: 1, 128>}, {pipeline_mode = #tpu.pipeline_mode<synchronous>, transform_indices = @transform_6, window_bounds = array<i64: 128, 128>}, {transform_indices = @transform_7, window_bounds = array<i64: 8, 128>}]} {
    %c0 = arith.constant 0 : index
    %c0_0 = arith.constant 0 : index
    %0 = vector.load %arg1[%c0, %c0_0] : memref<8x2xf32, #tpu.memory_space<vmem>>, vector<8x2xf32>
    %1 = vector.extract_strided_slice %0 {offsets = [0, 0], sizes = [8, 1], strides = [1, 1]} : vector<8x2xf32> to vector<8x1xf32>
    %c0_1 = arith.constant 0 : index
    %c0_2 = arith.constant 0 : index
    %2 = vector.load %arg2[%c0_1, %c0_2] : memref<2x32xf32, #tpu.memory_space<vmem>>, vector<1x32xf32>
    %3 = vector.broadcast %1 : vector<8x1xf32> to vector<8x32xf32>
    %4 = vector.broadcast %2 : vector<1x32xf32> to vector<8x32xf32>
    %5 = arith.mulf %3, %4 : vector<8x32xf32>
    %6 = vector.extract_strided_slice %0 {offsets = [0, 1], sizes = [8, 1], strides = [1, 1]} : vector<8x2xf32> to vector<8x1xf32>
    %c1 = arith.constant 1 : index
    %c0_3 = arith.constant 0 : index
    %7 = vector.load %arg2[%c1, %c0_3] : memref<2x32xf32, #tpu.memory_space<vmem>>, vector<1x32xf32>
    %8 = vector.broadcast %6 : vector<8x1xf32> to vector<8x32xf32>
    %9 = vector.broadcast %7 : vector<1x32xf32> to vector<8x32xf32>
    %10 = arith.mulf %8, %9 : vector<8x32xf32>
    %11 = arith.addf %5, %10 : vector<8x32xf32>
    %c0_4 = arith.constant 0 : index
    %c0_5 = arith.constant 0 : index
    %12 = vector.load %arg3[%c0_4, %c0_5] : memref<1x32xf32, #tpu.memory_space<vmem>>, vector<1x32xf32>
    %13 = vector.broadcast %12 : vector<1x32xf32> to vector<8x32xf32>
    %14 = arith.addf %11, %13 : vector<8x32xf32>
    %15 = math.tanh %14 : vector<8x32xf32>
    %c0_6 = arith.constant 0 : index
    %c0_7 = arith.constant 0 : index
    %16 = vector.load %arg4[%c0_6, %c0_7] : memref<32x160xf32, #tpu.memory_space<vmem>>, vector<32x160xf32>
    %cst = arith.constant dense<0.000000e+00> : vector<8x160xf32>
    %17 = tpu.matmul %15, %16, %cst {dimension_numbers = #tpu.dot_dimension_numbers<[1], [0], [0], [1], [0, 0, 1, 1], [], []>} : vector<8x32xf32>, vector<32x160xf32>, vector<8x160xf32> -> vector<8x160xf32>
    %c0_8 = arith.constant 0 : index
    %c0_9 = arith.constant 0 : index
    %18 = vector.load %arg5[%c0_8, %c0_9] : memref<1x160xf32, #tpu.memory_space<vmem>>, vector<1x160xf32>
    %19 = vector.broadcast %18 : vector<1x160xf32> to vector<8x160xf32>
    %20 = arith.addf %17, %19 : vector<8x160xf32>
    %21 = vector.extract_strided_slice %20 {offsets = [0, 0], sizes = [8, 128], strides = [1, 1]} : vector<8x160xf32> to vector<8x128xf32>
    %22 = vector.extract_strided_slice %20 {offsets = [0, 128], sizes = [8, 32], strides = [1, 1]} : vector<8x160xf32> to vector<8x32xf32>
    %c0_10 = arith.constant 0 : index
    %c0_11 = arith.constant 0 : index
    %23 = vector.load %arg6[%c0_10, %c0_11] : memref<1x128xf32, #tpu.memory_space<vmem>>, vector<1x128xf32>
    %cst_12 = arith.constant 2.000000e+00 : f32
    %24 = vector.broadcast %cst_12 : f32 to vector<8x128xf32>
    %25 = arith.mulf %24, %21 : vector<8x128xf32>
    %26 = vector.broadcast %23 : vector<1x128xf32> to vector<8x128xf32>
    %27 = arith.subf %26, %25 : vector<8x128xf32>
    %28 = tpu.iota {dimensions = array<i32: 1>} : vector<8x128xi32>
    %cst_13 = arith.constant dense<0x7F800000> : vector<8xf32>
    %29 = vector.multi_reduction <minimumf>, %27, %cst_13 [1] : vector<8x128xf32> to vector<8xf32>
    %30 = vector.shape_cast %29 : vector<8xf32> to vector<8x1xf32>
    %31 = vector.broadcast %30 : vector<8x1xf32> to vector<8x128xf32>
    %32 = arith.cmpf ole, %27, %31 : vector<8x128xf32>
    %c128_i32 = arith.constant 128 : i32
    %33 = vector.broadcast %c128_i32 : i32 to vector<8x128xi32>
    %34 = arith.select %32, %28, %33 : vector<8x128xi1>, vector<8x128xi32>
    %cst_14 = arith.constant dense<2147483647> : vector<8xi32>
    %35 = vector.multi_reduction <minsi>, %34, %cst_14 [1] : vector<8x128xi32> to vector<8xi32>
    %36 = vector.shape_cast %35 : vector<8xi32> to vector<8x1xi32>
    %37 = vector.broadcast %36 : vector<8x1xi32> to vector<8x128xi32>
    %38 = arith.cmpi eq, %28, %37 : vector<8x128xi32>
    %39 = arith.extui %38 : vector<8x128xi1> to vector<8x128xi32>
    %40 = arith.sitofp %39 : vector<8x128xi32> to vector<8x128xf32>
    %c0_15 = arith.constant 0 : index
    %c0_16 = arith.constant 0 : index
    %41 = vector.load %arg7[%c0_15, %c0_16] : memref<128x128xf32, #tpu.memory_space<vmem>>, vector<128x128xf32>
    %cst_17 = arith.constant dense<0.000000e+00> : vector<8x128xf32>
    %42 = tpu.matmul %40, %41, %cst_17 {dimension_numbers = #tpu.dot_dimension_numbers<[1], [0], [0], [1], [0, 0, 1, 1], [], []>} : vector<8x128xf32>, vector<128x128xf32>, vector<8x128xf32> -> vector<8x128xf32>
    %c0_18 = arith.constant 0 : index
    %c0_19 = arith.constant 0 : index
    %43 = vector.load %arg8[%c0_18, %c0_19] : memref<8x128xf32, #tpu.memory_space<vmem>>, vector<8x128xf32>
    tpu.vector_store %arg8[%c0_18, %c0_19], %42 {strides = array<i32>} : memref<8x128xf32, #tpu.memory_space<vmem>>, vector<8x128xf32>,
    %c0_20 = arith.constant 0 : index
    %c0_21 = arith.constant 0 : index
    %44 = vector.load %arg8[%c0_20, %c0_21] : memref<8x128xf32, #tpu.memory_space<vmem>>, vector<8x32xf32>
    tpu.vector_store %arg8[%c0_20, %c0_21], %22 {strides = array<i32>} : memref<8x128xf32, #tpu.memory_space<vmem>>, vector<8x32xf32>,
    return
  }
  func.func @transform_0(%arg0: i32) -> (i32, i32) {
    %c0_i32 = arith.constant 0 : i32
    %c0_i32_0 = arith.constant 0 : i32
    return %arg0, %c0_i32 : i32, i32
  }
  func.func @transform_1(%arg0: i32) -> (i32, i32) {
    %c0_i32 = arith.constant 0 : i32
    %c0_i32_0 = arith.constant 0 : i32
    %c0_i32_1 = arith.constant 0 : i32
    return %c0_i32, %c0_i32_0 : i32, i32
  }
  func.func @transform_2(%arg0: i32) -> (i32, i32) {
    %c0_i32 = arith.constant 0 : i32
    %c0_i32_0 = arith.constant 0 : i32
    %c0_i32_1 = arith.constant 0 : i32
    return %c0_i32, %c0_i32_0 : i32, i32
  }
  func.func @transform_3(%arg0: i32) -> (i32, i32) {
    %c0_i32 = arith.constant 0 : i32
    %c0_i32_0 = arith.constant 0 : i32
    %c0_i32_1 = arith.constant 0 : i32
    return %c0_i32, %c0_i32_0 : i32, i32
  }
  func.func @transform_4(%arg0: i32) -> (i32, i32) {
    %c0_i32 = arith.constant 0 : i32
    %c0_i32_0 = arith.constant 0 : i32
    %c0_i32_1 = arith.constant 0 : i32
    return %c0_i32, %c0_i32_0 : i32, i32
  }
  func.func @transform_5(%arg0: i32) -> (i32, i32) {
    %c0_i32 = arith.constant 0 : i32
    %c0_i32_0 = arith.constant 0 : i32
    %c0_i32_1 = arith.constant 0 : i32
    return %c0_i32, %c0_i32_0 : i32, i32
  }
  func.func @transform_6(%arg0: i32) -> (i32, i32) {
    %c0_i32 = arith.constant 0 : i32
    %c0_i32_0 = arith.constant 0 : i32
    %c0_i32_1 = arith.constant 0 : i32
    return %c0_i32, %c0_i32_0 : i32, i32
  }
  func.func @transform_7(%arg0: i32) -> (i32, i32) {
    %c0_i32 = arith.constant 0 : i32
    %c0_i32_0 = arith.constant 0 : i32
    return %arg0, %c0_i32 : i32, i32
  }
}

</mosaic_0001>

<llo_original>
// kernel: tpu_custom_call.1
$region0: #{tpu_custom_call.1}
  #allocation0 [shape = 'u32[]', space=smem, size = 0x4, offset = 0x4, fixed_abs, tag = 'smem constant byte address 0x4 - core index']
  #allocation1 [shape = 'u32[144,128]{1,0:T(1,128)}', space=vmem, size = 0x12000, scoped, tag = 'internal scratch']
  %s0 = inlined_call_operand.vmem [shape: f32[8,2], index: 0, kind: input, shape index: {}]
  %s1 = inlined_call_operand.vmem [shape: f32[2,32], index: 1, kind: input, shape index: {}]
  %s2 = inlined_call_operand.vmem [shape: f32[1,32], index: 2, kind: input, shape index: {}]
  %s3 = inlined_call_operand.hbm [shape: f32[32,160], index: 3, kind: input, shape index: {}]
  %s4 = inlined_call_operand.vmem [shape: f32[1,160], index: 4, kind: input, shape index: {}]
  %s5 = inlined_call_operand.vmem [shape: f32[1,128], index: 5, kind: input, shape index: {}]
  %s6 = inlined_call_operand.hbm [shape: f32[128,128], index: 6, kind: input, shape index: {}]
  %s7 = inlined_call_operand.hbm [shape: f32[8,128], index: 7, kind: output, shape index: {}]
  %s8 = sld [smem:[#allocation0]]
  $region46: #{tpu_custom_call.1} parent=0
    _
  %s10 = ssub.s32 1, %s8
  %s11 = scalar_select 0, %s10, %s8
  $region1: #{tpu_custom_call.1} parent=0
    #allocation2 [shape = 'u8[32768]{0}', space=vmem, size = 0x8000, scoped, tag = 'input window, operand 3, single buffered']
    #allocation3 [shape = 's32[1]{0}', space=sflag, size = 0x4, scoped, tag = 'scoped memory for tpu_custom_call.1']
    #allocation4 [shape = 's32[1]{0}', space=sflag, size = 0x4, scoped, tag = 'scoped memory for tpu_custom_call.1']
    #allocation5 [shape = 'u8[65536]{0}', space=vmem, size = 0x10000, scoped, tag = 'input window, operand 6, single buffered']
    #allocation6 [shape = 's32[1]{0}', space=sflag, size = 0x4, scoped, tag = 'scoped memory for tpu_custom_call.1']
    #allocation7 [shape = 'u8[4096]{0}', space=vmem, size = 0x1000, scoped, tag = 'output window, operand 0, single buffered']
    %12 = vsyncpa [#allocation3], 0
    %13 = vsyncpa [#allocation6], 0
    %14 = vsyncpa [#allocation4], 0
    // Predicated region
    $region2: #{tpu_custom_call.1} parent=1 // pred_check
      _
    $region3: #{tpu_custom_call.1} parent=1 // pred_check_branch
      %16 = sbr.rel (0) target = $region5
    $region4: #{tpu_custom_call.1} parent=1 // pred_region
      _
    $region5: #{tpu_custom_call.1} parent=1 // pred_fallthru
      _
    // Predicated region
    $region6: #{tpu_custom_call.1} parent=1 // pred_check
      _
    $region7: #{tpu_custom_call.1} parent=1 // pred_check_branch
      %18 = sbr.rel (0) target = $region9
    $region8: #{tpu_custom_call.1} parent=1 // pred_region
      _
    $region9: #{tpu_custom_call.1} parent=1 // pred_fallthru
      _
    // Predicated region
    $region10: #{tpu_custom_call.1} parent=1 // pred_check
      _
    $region11: #{tpu_custom_call.1} parent=1 // pred_check_branch
      %20 = sbr.rel (0) target = $region13
    $region12: #{tpu_custom_call.1} parent=1 // pred_region
      _
    $region13: #{tpu_custom_call.1} parent=1 // pred_fallthru
      _
    // Predicated region
    $region14: #{tpu_custom_call.1} parent=1 // pred_check
      _
    $region15: #{tpu_custom_call.1} parent=1 // pred_check_branch
      %22 = sbr.rel (0) target = $region17
    $region16: #{tpu_custom_call.1} parent=1 // pred_region
      %s24 = ssub.s32 1024, 1024
      %25 = vsyncadd [#allocation3], %s24
      %s26 = sshll.u32 [#allocation2], 4
      %s27 = int_to_ptr.vmem [resolvable:$true] %s26
      %32 = dma.hbm_to_vmem [thread:$0]  %s3, 1024, %s27, [#allocation3], 256, 256, 16
    $region17: #{tpu_custom_call.1} parent=1 // pred_fallthru
      _
    // Predicated region
    $region18: #{tpu_custom_call.1} parent=1 // pred_check
      _
    $region19: #{tpu_custom_call.1} parent=1 // pred_check_branch
      %34 = sbr.rel (0) target = $region21
    $region20: #{tpu_custom_call.1} parent=1 // pred_region
      _
    $region21: #{tpu_custom_call.1} parent=1 // pred_fallthru
      _
    // Predicated region
    $region22: #{tpu_custom_call.1} parent=1 // pred_check
      _
    $region23: #{tpu_custom_call.1} parent=1 // pred_check_branch
      %36 = sbr.rel (0) target = $region25
    $region24: #{tpu_custom_call.1} parent=1 // pred_region
      _
    $region25: #{tpu_custom_call.1} parent=1 // pred_fallthru
      _
    // Predicated region
    $region26: #{tpu_custom_call.1} parent=1 // pred_check
      _
    $region27: #{tpu_custom_call.1} parent=1 // pred_check_branch
      %38 = sbr.rel (0) target = $region29
    $region28: #{tpu_custom_call.1} parent=1 // pred_region
      %s40 = ssub.s32 2048, 2048
      %41 = vsyncadd [#allocation6], %s40
      %s42 = sshll.u32 [#allocation5], 4
      %s43 = int_to_ptr.vmem [resolvable:$true] %s42
      %48 = dma.hbm_to_vmem [thread:$0]  %s6, 2048, %s43, [#allocation6], 128, 128, 8
    $region29: #{tpu_custom_call.1} parent=1 // pred_fallthru
      _
    // Predicated region
    $region30: #{tpu_custom_call.1} parent=1 // pred_check
      _
    $region31: #{tpu_custom_call.1} parent=1 // pred_check_branch
      %50 = sbr.rel (0) target = $region33
    $region32: #{tpu_custom_call.1} parent=1 // pred_region
      %51 = dma.done [#allocation3], 1024
    $region33: #{tpu_custom_call.1} parent=1 // pred_fallthru
      _
    // Predicated region
    $region34: #{tpu_custom_call.1} parent=1 // pred_check
      _
    $region35: #{tpu_custom_call.1} parent=1 // pred_check_branch
      %53 = sbr.rel (0) target = $region37
    $region36: #{tpu_custom_call.1} parent=1 // pred_region
      %54 = dma.done [#allocation6], 2048
    $region37: #{tpu_custom_call.1} parent=1 // pred_fallthru
      _
    %v55 = vld [vmem:[%s0] sm:$0xff]
    %v56 = vld [vmem:[%s1] sm:$0x1]
    %58 = vset.pattern.permute.xlu0 0
    %59 = vperm.xlu0 %58, %v55
    %v60 = vpop.permute.xlu0 %59
    %v62 = vlaneseq
    %v63 = vshrl.u32 %v62, 7
    %v64 = vsub.s32 0, %v63
    %v65 = vrot.slane %v56, %v64
    %v66 = vmul.f32 %v60, %v65
    %v67 = vld [vmem:[%s1 + $0x1] sm:$0x1]
    %68 = vset.pattern.permute.xlu0 1
    %69 = vperm.xlu0 %68, %v55
    %v70 = vpop.permute.xlu0 %69
    %v72 = vlaneseq
    %v73 = vshrl.u32 %v72, 7
    %v74 = vsub.s32 0, %v73
    %v75 = vrot.slane %v67, %v74
    %v76 = vmul.f32 %v70, %v75
    %v77 = vadd.f32 %v66, %v76
    %v78 = vld [vmem:[%s2] sm:$0x1]
    %v80 = vlaneseq
    %v81 = vshrl.u32 %v80, 7
    %v82 = vsub.s32 0, %v81
    %v83 = vrot.slane %v78, %v82
    %v85 = vadd.f32 %v77, %v83
    %v86 = vtanh.pop %v85
    %v87 = vld [vmem:[#allocation2] sm:$0xff]
    %v88 = vld [vmem:[#allocation2 + $0x8] sm:$0xff]
    %v89 = vld [vmem:[#allocation2 + $0x10] sm:$0xff]
    %v90 = vld [vmem:[#allocation2 + $0x18] sm:$0xff]
    %v91 = vld [vmem:[#allocation2 + $0x20] sm:$0xff]
    %v92 = vld [vmem:[#allocation2 + $0x28] sm:$0xff]
    %v93 = vld [vmem:[#allocation2 + $0x30] sm:$0xff]
    %v94 = vld [vmem:[#allocation2 + $0x38] sm:$0xff]
    %v95 = vld [vmem:[%s4] sm:$0x3]
    %v97 = vlaneseq
    %v98 = vshrl.u32 %v97, 7
    %v99 = vsub.s32 0, %v98
    %v100 = vrot.slane %v95, %v99
    %v101 = vlaneseq
    %v102 = vshrl.u32 %v101, 7
    %v103 = vsub.s32 1, %v102
    %v104 = vrot.slane %v95, %v103
    %vm107 = vcmask 261120
    %v109 = vsel %vm107, %v86, 0
    %111 = vmatprep.subr.mxu0 %v88
    %112 = vmatpush1.msra.mxu0 %v87
    %113 = vmatprep.subr.mxu0 %v90
    %114 = vmatpush1.msra.mxu0 %v89
    %115 = vmatprep.subr.mxu0 %v92
    %116 = vmatpush1.msra.mxu0 %v91
    %117 = vmatprep.subr.mxu0 %v94
    %118 = vmatpush1.msra.mxu0 %v93
    %119 = vmatprep.subr.mxu0 0.0
    %120 = vmatpush1.msra.mxu0 0.0
    %121 = vmatprep.subr.mxu0 0.0
    %122 = vmatpush1.msra.mxu0 0.0
    %123 = vmatprep.subr.mxu0 0.0
    %124 = vmatpush1.msra.mxu0 0.0
    %125 = vmatprep.subr.mxu0 0.0
    %126 = vmatpush1.msra.mxu0 0.0
    %127 = vmatprep.subr.mxu0 0.0
    %128 = vmatpush1.msra.mxu0 0.0
    %129 = vmatprep.subr.mxu0 0.0
    %130 = vmatpush1.msra.mxu0 0.0
    %131 = vmatprep.subr.mxu0 0.0
    %132 = vmatpush1.msra.mxu0 0.0
    %133 = vmatprep.subr.mxu0 0.0
    %134 = vmatpush1.msra.mxu0 0.0
    %135 = vmatprep.subr.mxu0 0.0
    %136 = vmatpush1.msra.mxu0 0.0
    %137 = vmatprep.subr.mxu0 0.0
    %138 = vmatpush1.msra.mxu0 0.0
    %139 = vmatprep.subr.mxu0 0.0
    %140 = vmatpush1.msra.mxu0 0.0
    %141 = vmatprep.subr.mxu0 0.0
    %142 = vmatpush1.msra.mxu0 0.0
    %143 = vmatprep.subr.mxu0 0.0
    %144 = vmatpush1.msra.mxu0 0.0
    %145 = vmatprep.subr.mxu0 0.0
    %146 = vmatpush1.msra.mxu0 0.0
    %147 = vmatprep.subr.mxu0 0.0
    %148 = vmatpush1.msra.mxu0 0.0
    %149 = vmatprep.subr.mxu0 0.0
    %150 = vmatpush1.msra.mxu0 0.0
    %151 = vmatprep.subr.mxu0 0.0
    %152 = vmatpush1.msra.mxu0 0.0
    %153 = vmatprep.subr.mxu0 0.0
    %154 = vmatpush1.msra.mxu0 0.0
    %155 = vmatprep.subr.mxu0 0.0
    %156 = vmatpush1.msra.mxu0 0.0
    %157 = vmatprep.subr.mxu0 0.0
    %158 = vmatpush1.msra.mxu0 0.0
    %159 = vmatprep.subr.mxu0 0.0
    %160 = vmatpush1.msra.mxu0 0.0
    %161 = vmatprep.subr.mxu0 0.0
    %162 = vmatpush1.msra.mxu0 0.0
    %163 = vmatprep.subr.mxu0 0.0
    %164 = vmatpush1.msra.mxu0 0.0
    %165 = vmatprep.subr.mxu0 0.0
    %166 = vmatpush1.msra.mxu0 0.0
    %167 = vmatprep.subr.mxu0 0.0
    %168 = vmatpush1.msra.mxu0 0.0
    %169 = vmatprep.subr.mxu0 0.0
    %170 = vmatpush1.msra.mxu0 0.0
    %171 = vmatprep.subr.mxu0 0.0
    %172 = vmatpush1.msra.mxu0 0.0
    %173 = vmatprep.subr.mxu0 0.0
    %174 = vmatpush1.msra.mxu0 0.0
    %175 = vmatprep.mubr.f32.mxu0 0.0
    %176 = vmatmul.mubr.f32.gmra.mrb[0].mxu0 %v109
    %v177 = vpop.f32.mrb[0].mxu0
    %v178 = vadd.f32 %v100, %v177
    %v179 = vpop.f32.mrb[0].mxu0
    %v180 = vadd.f32 %v104, %v179
    %181 = vdwg.mxu0
    %v182 = vld [vmem:[%s5] sm:$0x1]
    %v183 = vmul.f32 %v178, 2.0
    %v185 = vlaneseq
    %v186 = vshrl.u32 %v185, 7
    %v187 = vsub.s32 0, %v186
    %v188 = vrot.slane %v182, %v187
    %v190 = vsub.f32 %v188, %v183
    %v191 = vlaneseq
    %v192 = vand.u32 %v191, 127
    %193 = vmin.xlane.f32.xlu0 %v190
    %v194 = vpop.xlane.xlu0 %193
    %vm195 = vcmp.le.f32.partialorder %v190, %v194
    %v196 = vsel %vm195, %v192, 128
    %v197 = vand.u32 %v196, 65535
    %v198 = vshra.s32 %v196, 16
    %v199 = vcvt.s32.f32 %v197
    %v200 = vcvt.s32.f32 %v198
    %201 = vmin.xlane.f32.xlu0 %v200
    %v202 = vpop.xlane.xlu0 %201
    %vm203 = vcmp.eq.f32.partialorder %v200, %v202
    %v204 = vsel %vm203, %v199, inf
    %205 = vmin.xlane.f32.xlu0 %v204
    %v206 = vpop.xlane.xlu0 %205
    %v207 = vcvt.f32.s32 %v206
    %v208 = vcvt.f32.s32 %v202
    %v209 = vshll.u32 %v208, 16
    %v210 = vadd.s32 %v209, %v207
    %vm211 = vcmp.eq.s32.totalorder %v192, %v210
    %v212 = vsel %vm211, 1, 0
    %v213 = vcvt.s32.f32 %v212
    %v214 = vld [vmem:[#allocation5] sm:$0xff]
    %v215 = vld [vmem:[#allocation5 + $0x8] sm:$0xff]
    %v216 = vld [vmem:[#allocation5 + $0x10] sm:$0xff]
    %v217 = vld [vmem:[#allocation5 + $0x18] sm:$0xff]
    %v218 = vld [vmem:[#allocation5 + $0x20] sm:$0xff]
    %v219 = vld [vmem:[#allocation5 + $0x28] sm:$0xff]
    %v220 = vld [vmem:[#allocation5 + $0x30] sm:$0xff]
    %v221 = vld [vmem:[#allocation5 + $0x38] sm:$0xff]
    %v222 = vld [vmem:[#allocation5 + $0x40] sm:$0xff]
    %v223 = vld [vmem:[#allocation5 + $0x48] sm:$0xff]
    %v224 = vld [vmem:[#allocation5 + $0x50] sm:$0xff]
    %v225 = vld [vmem:[#allocation5 + $0x58] sm:$0xff]
    %v226 = vld [vmem:[#allocation5 + $0x60] sm:$0xff]
    %v227 = vld [vmem:[#allocation5 + $0x68] sm:$0xff]
    %v228 = vld [vmem:[#allocation5 + $0x70] sm:$0xff]
    %v229 = vld [vmem:[#allocation5 + $0x78] sm:$0xff]
    %230 = vmatprep.subr.mxu0 0.0
    %231 = vmatpush1.msra.mxu0 %v214
    %232 = vmatprep.subr.mxu0 0.0
    %233 = vmatpush1.msra.mxu0 %v215
    %234 = vmatprep.subr.mxu0 0.0
    %235 = vmatpush1.msra.mxu0 %v216
    %236 = vmatprep.subr.mxu0 0.0
    %237 = vmatpush1.msra.mxu0 %v217
    %238 = vmatprep.subr.mxu0 0.0
    %239 = vmatpush1.msra.mxu0 %v218
    %240 = vmatprep.subr.mxu0 0.0
    %241 = vmatpush1.msra.mxu0 %v219
    %242 = vmatprep.subr.mxu0 0.0
    %243 = vmatpush1.msra.mxu0 %v220
    %244 = vmatprep.subr.mxu0 0.0
    %245 = vmatpush1.msra.mxu0 %v221
    %246 = vmatprep.subr.mxu0 0.0
    %247 = vmatpush1.msra.mxu0 %v222
    %248 = vmatprep.subr.mxu0 0.0
    %249 = vmatpush1.msra.mxu0 %v223
    %250 = vmatprep.subr.mxu0 0.0
    %251 = vmatpush1.msra.mxu0 %v224
    %252 = vmatprep.subr.mxu0 0.0
    %253 = vmatpush1.msra.mxu0 %v225
    %254 = vmatprep.subr.mxu0 0.0
    %255 = vmatpush1.msra.mxu0 %v226
    %256 = vmatprep.subr.mxu0 0.0
    %257 = vmatpush1.msra.mxu0 %v227
    %258 = vmatprep.subr.mxu0 0.0
    %259 = vmatpush1.msra.mxu0 %v228
    %260 = vmatprep.subr.mxu0 0.0
    %261 = vmatpush1.msra.mxu0 %v229
    %262 = vmatprep.subr.mxu0 0.0
    %263 = vmatpush1.msra.mxu0 0.0
    %264 = vmatprep.subr.mxu0 0.0
    %265 = vmatpush1.msra.mxu0 0.0
    %266 = vmatprep.subr.mxu0 0.0
    %267 = vmatpush1.msra.mxu0 0.0
    %268 = vmatprep.subr.mxu0 0.0
    %269 = vmatpush1.msra.mxu0 0.0
    %270 = vmatprep.subr.mxu0 0.0
    %271 = vmatpush1.msra.mxu0 0.0
    %272 = vmatprep.subr.mxu0 0.0
    %273 = vmatpush1.msra.mxu0 0.0
    %274 = vmatprep.subr.mxu0 0.0
    %275 = vmatpush1.msra.mxu0 0.0
    %276 = vmatprep.subr.mxu0 0.0
    %277 = vmatpush1.msra.mxu0 0.0
    %278 = vmatprep.subr.mxu0 0.0
    %279 = vmatpush1.msra.mxu0 0.0
    %280 = vmatprep.subr.mxu0 0.0
    %281 = vmatpush1.msra.mxu0 0.0
    %282 = vmatprep.subr.mxu0 0.0
    %283 = vmatpush1.msra.mxu0 0.0
    %284 = vmatprep.subr.mxu0 0.0
    %285 = vmatpush1.msra.mxu0 0.0
    %286 = vmatprep.subr.mxu0 0.0
    %287 = vmatpush1.msra.mxu0 0.0
    %288 = vmatprep.subr.mxu0 0.0
    %289 = vmatpush1.msra.mxu0 0.0
    %290 = vmatprep.subr.mxu0 0.0
    %291 = vmatpush1.msra.mxu0 0.0
    %292 = vmatprep.subr.mxu0 0.0
    %293 = vmatpush1.msra.mxu0 0.0
    %294 = vmatprep.mubr.f32.mxu0 0.0
    %295 = vmatmul.mubr.f32.gmra.mrb[0].mxu0 %v213
    %v296 = vpop.f32.mrb[0].mxu0
    %v297 = vadd.f32 0.0, %v296
    %v298 = vpop.f32.mrb[0].mxu0
    %299 = vdwg.mxu0
    %300 = vst [vmem:[#allocation7] sm:$0xff] %v297
    %301 = vst.msk [vmem:[#allocation7] sm:$0xff] %vm107, %v180
    // Predicated region
    $region38: #{tpu_custom_call.1} parent=1 // pred_check
      _
    $region39: #{tpu_custom_call.1} parent=1 // pred_check_branch
      %303 = sbr.rel (0) target = $region41
    $region40: #{tpu_custom_call.1} parent=1 // pred_region
      %s305 = ssub.s32 128, 128
      %306 = vsyncadd [#allocation4], %s305
      %s308 = sshll.u32 [#allocation7], 4
      %s309 = int_to_ptr.vmem [resolvable:$true] %s308
      %311 = dma.vmem_to_hbm [thread:$0]  %s309, 128, %s7, [#allocation4]
    $region41: #{tpu_custom_call.1} parent=1 // pred_fallthru
      _
    // Predicated region
    $region42: #{tpu_custom_call.1} parent=1 // pred_check
      _
    $region43: #{tpu_custom_call.1} parent=1 // pred_check_branch
      %313 = sbr.rel (0) target = $region45
    $region44: #{tpu_custom_call.1} parent=1 // pred_region
      %314 = dma.done [#allocation4], 128
    $region45: #{tpu_custom_call.1} parent=1 // pred_fallthru
      _
    %315 = vsyncpa [#allocation3], 1
    %316 = vsyncpa [#allocation6], 1
    %317 = vsyncpa [#allocation4], 1

</llo_original>
